<compile_context>
chip_gen: v6e
topology: v6e:2x2x1
jax: 0.10.0
libtpu: 0.0.40
codegen_flags: <defaults>
</compile_context>

<pallas_src>
import jax
import jax.numpy as jnp
from jax.experimental import pallas as pl
from jax.experimental.pallas import tpu as pltpu


def _round_up(x, m):
    return (x + m - 1) // m * m


def _vmem_limit_bytes():
    """~75% of physical VMEM, capped: ~48 MiB on v7x, ~96 MiB on v5e/v6e."""
    cap = 64 * 1024 * 1024
    try:
        cap = int(getattr(pltpu.get_tpu_info(), "vmem_capacity_bytes", cap))
    except Exception:
        pass
    return int(min(max(cap * 3 // 4, 32 * 1024 * 1024), 100 * 1024 * 1024))


def _choose_tile_h(H, W, pad, Cin, Cout, in_itemsize, vmem_limit):
    """Largest divisor of H whose double-buffered blocks fit the VMEM budget.

    The estimate counts the 128-lane physical padding Mosaic applies to small
    trailing channel dims, so it is conservative.
    """
    Wp = W + 2 * pad
    budget = max(vmem_limit // 3, 4 * 1024 * 1024)
    cands = [d for d in range(H, 0, -1)
             if H % d == 0 and (d == H or (d * W) % 8 == 0)]
    for th in cands:
        in_blk = (th + 2 * pad) * Wp * _round_up(Cin, 128) * in_itemsize
        out_blk = th * W * _round_up(Cout, 128) * 4
        if 2 * (in_blk + out_blk) <= budget:
            return th
    return cands[-1]


def conv_layer_forward(x_nchw, weight, conv_bias, gamma, beta,
                       running_mean, running_var, eps=1e-5,
                       compute_dtype=jnp.bfloat16, tile_h=None):
    """ReLU(BN(Conv3x3_pad1(x) + bias)) — NCHW in, NCHW out (PyTorch layouts).

    compute_dtype: dtype fed to the MXU (bf16 by default — the perf path on
    v5e/v6e/v7x); accumulation, BN affine and ReLU always run in float32.
    """
    N, Cin, H, W = x_nchw.shape
    Cout, Cin_w, kH, kW = weight.shape
    assert Cin_w == Cin, "channel mismatch"
    # Only the module's default conv config (stride=1, dilation=1, groups=1,
    # square kernel) is implemented; padding = kernel_size[0] // 2 on both dims.
    assert kH == kW, "square kernels only (padding quirk of the module)"
    pad = kH // 2
    Hp, Wp = H + 2 * pad, W + 2 * pad
    K = kH * kW * Cin
    feed_dtype = jnp.dtype(compute_dtype)
    out_dtype = x_nchw.dtype            # TODO(synk): optional bf16 writeback
    in_itemsize = feed_dtype.itemsize

    vmem_limit = _vmem_limit_bytes()
    if tile_h is None:
        tile_h = _choose_tile_h(H, W, pad, Cin, Cout, in_itemsize, vmem_limit)
    assert H % tile_h == 0 and (tile_h == H or (tile_h * W) % 8 == 0), \
        "tile_h must divide H and keep the output block sublane-aligned"
    n_h = H // tile_h
    tile_hp = tile_h + 2 * pad

    # ---- layout plumbing in plain JAX (no compute, no 9x im2col in HBM) ----
    x_nhwc = jnp.transpose(x_nchw, (0, 2, 3, 1)).astype(feed_dtype)
    xpad = jnp.pad(x_nhwc, ((0, 0), (pad, pad), (pad, pad), (0, 0)))
    # Overlapping H-tiles (1-row halos each side) so plain BlockSpecs + auto
    # double buffering pipeline them; duplication is only 2*pad/tile_h rows.
    x_tiles = jnp.stack(
        [xpad[:, j * tile_h: j * tile_h + tile_hp] for j in range(n_h)],
        axis=1)                                          # (N, n_h, tile_hp, Wp, Cin)

    # weight (Cout, Cin, kH, kW) -> (kH*kW*Cin, Cout); column order must match
    # the in-kernel im2col build: tap-major (kh, kw), channel-minor.
    w_mat = jnp.transpose(weight, (2, 3, 1, 0)).reshape(K, Cout).astype(feed_dtype)

    # Fold BN (inference) and the conv bias: y = conv * scale + shift.
    scale = gamma / jnp.sqrt(running_var + eps)
    shift = beta + (conv_bias - running_mean) * scale
    scale = scale.reshape(1, Cout).astype(jnp.float32)
    shift = shift.reshape(1, Cout).astype(jnp.float32)

    def kernel(x_ref, w_ref, scale_ref, shift_ref, out_ref):
        # x_ref: (1, 1, tile_hp, Wp, Cin)   w_ref: (K, Cout)
        # scale/shift: (1, Cout) f32        out_ref: (1, tile_h*W, Cout)
        xi = x_ref[0, 0]                                  # padded H-tile
        # Build the im2col LHS ONCE per tile: kh slices are free (3rd-minor
        # axis offsets), the kw shifts are a single gather pass over the tile.
        cols = []
        for kh in range(kH):
            for kw in range(kW):
                tap = xi[kh:kh + tile_h, kw:kw + W, :]    # (tile_h, W, Cin)
                cols.append(tap.reshape(tile_h * W, Cin))
        lhs = jnp.concatenate(cols, axis=-1)              # (tile_h*W, K)
        # One fused MXU matmul (K = kH*kW*Cin), f32 accumulation in registers —
        # no accumulator scratch, no read-modify-write VMEM passes.
        acc = jnp.dot(lhs, w_ref[...], preferred_element_type=jnp.float32)
        y = acc * scale_ref[...] + shift_ref[...]         # folded BN + conv bias
        out_ref[0] = jnp.maximum(y, 0.0).astype(out_ref.dtype)   # single writeback

    cost = pl.CostEstimate(
        flops=2 * N * H * W * K * Cout,
        transcendentals=0,
        bytes_accessed=(x_tiles.size * in_itemsize
                        + w_mat.size * in_itemsize
                        + 2 * Cout * 4
                        + N * H * W * Cout * jnp.dtype(out_dtype).itemsize),
    )

    out = pl.pallas_call(
        kernel,
        out_shape=jax.ShapeDtypeStruct((N, H * W, Cout), out_dtype),
        grid=(N, n_h),
        in_specs=[
            # streamed, double-buffered H-tile (with halo rows)
            pl.BlockSpec((1, 1, tile_hp, Wp, Cin), lambda n, j: (n, j, 0, 0, 0)),
            # VMEM-resident operands (index pinned to block 0)
            pl.BlockSpec((K, Cout), lambda n, j: (0, 0)),
            pl.BlockSpec((1, Cout), lambda n, j: (0, 0)),
            pl.BlockSpec((1, Cout), lambda n, j: (0, 0)),
        ],
        # Output written at Cout width (not padded to 128): far less HBM
        # writeback for small Cout, at the cost of masked (vst.msk) stores.
        out_specs=pl.BlockSpec((1, tile_h * W, Cout), lambda n, j: (n, j, 0)),
        compiler_params=pltpu.CompilerParams(
            dimension_semantics=("parallel", "parallel"),  # batch & H tiles over TCs
            vmem_limit_bytes=vmem_limit,                   # ~48MiB v7x / ~96MiB v5e,v6e
        ),
        cost_estimate=cost,
    )(x_tiles, w_mat, scale, shift)

    # (N, H*W, Cout) -> NCHW (small: only Cout channels, no padding to slice).
    return jnp.transpose(out.reshape(N, H, W, Cout), (0, 3, 1, 2))


def _reference(x_nchw, weight, conv_bias, gamma, beta, running_mean,
               running_var, eps=1e-5):
    y = jax.lax.conv_general_dilated(
        x_nchw, weight, window_strides=(1, 1), padding="SAME",
        dimension_numbers=("NCHW", "OIHW", "NCHW"))
    y = y + conv_bias[None, :, None, None]
    scale = gamma / jnp.sqrt(running_var + eps)
    shift = beta - running_mean * scale
    y = y * scale[None, :, None, None] + shift[None, :, None, None]
    return jnp.maximum(y, 0.0)


if __name__ == "__main__":
    key = jax.random.PRNGKey(0)
    k_x, k_w, k_b, k_g, k_be, k_m, k_v = jax.random.split(key, 7)

    N, Cin, H, W = 2, 4, 16, 16
    Cout, kH, kW = 8, 3, 3

    x = jax.random.normal(k_x, (N, Cin, H, W), dtype=jnp.float32)
    weight = jax.random.normal(k_w, (Cout, Cin, kH, kW), dtype=jnp.float32) * 0.1
    conv_bias = jax.random.normal(k_b, (Cout,), dtype=jnp.float32) * 0.1
    gamma = jax.random.normal(k_g, (Cout,), dtype=jnp.float32) * 0.1 + 1.0
    beta = jax.random.normal(k_be, (Cout,), dtype=jnp.float32) * 0.1
    running_mean = jax.random.normal(k_m, (Cout,), dtype=jnp.float32) * 0.1
    running_var = jax.random.uniform(k_v, (Cout,), dtype=jnp.float32,
                                     minval=0.5, maxval=1.5)

    ref = _reference(x, weight, conv_bias, gamma, beta, running_mean, running_var)

    # Exact-parity path: f32 feed, H-tiled grid (2 halo tiles of 8 rows).
    out_f32 = conv_layer_forward(x, weight, conv_bias, gamma, beta,
                                 running_mean, running_var,
                                 compute_dtype=jnp.float32, tile_h=8)
    out_f32 = jax.block_until_ready(out_f32)
    assert out_f32.shape == (N, Cout, H, W)
    assert jnp.allclose(out_f32, ref, atol=1e-4, rtol=1e-4), "f32 mismatch vs reference"

    # Default perf path: bf16 feed / f32 MXU accumulation, auto-sized H tile.
    out_bf16 = conv_layer_forward(x, weight, conv_bias, gamma, beta,
                                  running_mean, running_var)
    out_bf16 = jax.block_until_ready(out_bf16)
    assert out_bf16.shape == (N, Cout, H, W)
    assert jnp.allclose(out_bf16, ref, atol=1e-1, rtol=1e-1), "bf16 mismatch vs reference"

    print("KERNEL_OK")
</pallas_src>

<mosaic_0001>
module attributes {stable_mosaic.version = 11 : i64} {
  func.func @kernel(%arg0: i32, %arg1: i32, %arg2: memref<1x1x10x18x4xf32, #tpu.memory_space<vmem>>, %arg3: memref<36x8xf32, #tpu.memory_space<vmem>>, %arg4: memref<1x8xf32, #tpu.memory_space<vmem>>, %arg5: memref<1x8xf32, #tpu.memory_space<vmem>>, %arg6: memref<1x128x8xf32, #tpu.memory_space<vmem>>) attributes {dimension_semantics = [#tpu.dimension_semantics<parallel>, #tpu.dimension_semantics<parallel>], iteration_bounds = array<i64: 2, 2>, scalar_prefetch = 0 : i64, scratch_operands = 0 : i64, tpu.core_type = #tpu.core_type<tc>, window_params = [{transform_indices = @transform_0, window_bounds = array<i64: 1, 1, 10, 18, 4>}, {pipeline_mode = #tpu.pipeline_mode<synchronous>, transform_indices = @transform_1, window_bounds = array<i64: 36, 8>}, {pipeline_mode = #tpu.pipeline_mode<synchronous>, transform_indices = @transform_2, window_bounds = array<i64: 1, 8>}, {pipeline_mode = #tpu.pipeline_mode<synchronous>, transform_indices = @transform_3, window_bounds = array<i64: 1, 8>}, {transform_indices = @transform_4, window_bounds = array<i64: 1, 128, 8>}]} {
    %c0 = arith.constant 0 : index
    %c0_0 = arith.constant 0 : index
    %c0_1 = arith.constant 0 : index
    %c0_2 = arith.constant 0 : index
    %c0_3 = arith.constant 0 : index
    %0 = vector.load %arg2[%c0, %c0_0, %c0_1, %c0_2, %c0_3] : memref<1x1x10x18x4xf32, #tpu.memory_space<vmem>>, vector<1x1x10x18x4xf32>
    %1 = vector.shape_cast %0 : vector<1x1x10x18x4xf32> to vector<10x18x4xf32>
    %2 = vector.extract_strided_slice %1 {offsets = [0, 0, 0], sizes = [8, 16, 4], strides = [1, 1, 1]} : vector<10x18x4xf32> to vector<8x16x4xf32>
    %3 = vector.shape_cast %2 : vector<8x16x4xf32> to vector<128x4xf32>
    %4 = vector.extract_strided_slice %1 {offsets = [0, 1, 0], sizes = [8, 16, 4], strides = [1, 1, 1]} : vector<10x18x4xf32> to vector<8x16x4xf32>
    %5 = vector.shape_cast %4 : vector<8x16x4xf32> to vector<128x4xf32>
    %6 = vector.extract_strided_slice %1 {offsets = [0, 2, 0], sizes = [8, 16, 4], strides = [1, 1, 1]} : vector<10x18x4xf32> to vector<8x16x4xf32>
    %7 = vector.shape_cast %6 : vector<8x16x4xf32> to vector<128x4xf32>
    %8 = vector.extract_strided_slice %1 {offsets = [1, 0, 0], sizes = [8, 16, 4], strides = [1, 1, 1]} : vector<10x18x4xf32> to vector<8x16x4xf32>
    %9 = vector.shape_cast %8 : vector<8x16x4xf32> to vector<128x4xf32>
    %10 = vector.extract_strided_slice %1 {offsets = [1, 1, 0], sizes = [8, 16, 4], strides = [1, 1, 1]} : vector<10x18x4xf32> to vector<8x16x4xf32>
    %11 = vector.shape_cast %10 : vector<8x16x4xf32> to vector<128x4xf32>
    %12 = vector.extract_strided_slice %1 {offsets = [1, 2, 0], sizes = [8, 16, 4], strides = [1, 1, 1]} : vector<10x18x4xf32> to vector<8x16x4xf32>
    %13 = vector.shape_cast %12 : vector<8x16x4xf32> to vector<128x4xf32>
    %14 = vector.extract_strided_slice %1 {offsets = [2, 0, 0], sizes = [8, 16, 4], strides = [1, 1, 1]} : vector<10x18x4xf32> to vector<8x16x4xf32>
    %15 = vector.shape_cast %14 : vector<8x16x4xf32> to vector<128x4xf32>
    %16 = vector.extract_strided_slice %1 {offsets = [2, 1, 0], sizes = [8, 16, 4], strides = [1, 1, 1]} : vector<10x18x4xf32> to vector<8x16x4xf32>
    %17 = vector.shape_cast %16 : vector<8x16x4xf32> to vector<128x4xf32>
    %18 = vector.extract_strided_slice %1 {offsets = [2, 2, 0], sizes = [8, 16, 4], strides = [1, 1, 1]} : vector<10x18x4xf32> to vector<8x16x4xf32>
    %19 = vector.shape_cast %18 : vector<8x16x4xf32> to vector<128x4xf32>
    %20 = tpu.concatenate %3, %5, %7, %9, %11, %13, %15, %17, %19 in 1 : vector<128x4xf32>, vector<128x4xf32>, vector<128x4xf32>, vector<128x4xf32>, vector<128x4xf32>, vector<128x4xf32>, vector<128x4xf32>, vector<128x4xf32>, vector<128x4xf32> -> vector<128x36xf32>
    %c0_4 = arith.constant 0 : index
    %c0_5 = arith.constant 0 : index
    %21 = vector.load %arg3[%c0_4, %c0_5] : memref<36x8xf32, #tpu.memory_space<vmem>>, vector<36x8xf32>
    %cst = arith.constant dense<0.000000e+00> : vector<128x8xf32>
    %22 = tpu.matmul %20, %21, %cst {dimension_numbers = #tpu.dot_dimension_numbers<[1], [0], [0], [1], [0, 0, 1, 1], [], []>} : vector<128x36xf32>, vector<36x8xf32>, vector<128x8xf32> -> vector<128x8xf32>
    %c0_6 = arith.constant 0 : index
    %c0_7 = arith.constant 0 : index
    %23 = vector.load %arg4[%c0_6, %c0_7] : memref<1x8xf32, #tpu.memory_space<vmem>>, vector<1x8xf32>
    %24 = vector.broadcast %23 : vector<1x8xf32> to vector<128x8xf32>
    %25 = arith.mulf %22, %24 : vector<128x8xf32>
    %c0_8 = arith.constant 0 : index
    %c0_9 = arith.constant 0 : index
    %26 = vector.load %arg5[%c0_8, %c0_9] : memref<1x8xf32, #tpu.memory_space<vmem>>, vector<1x8xf32>
    %27 = vector.broadcast %26 : vector<1x8xf32> to vector<128x8xf32>
    %28 = arith.addf %25, %27 : vector<128x8xf32>
    %cst_10 = arith.constant 0.000000e+00 : f32
    %29 = vector.broadcast %cst_10 : f32 to vector<128x8xf32>
    %30 = arith.maximumf %28, %29 : vector<128x8xf32>
    %c0_11 = arith.constant 0 : index
    %c0_12 = arith.constant 0 : index
    %c0_13 = arith.constant 0 : index
    %31 = vector.load %arg6[%c0_11, %c0_12, %c0_13] : memref<1x128x8xf32, #tpu.memory_space<vmem>>, vector<1x128x8xf32>
    %32 = vector.shape_cast %31 : vector<1x128x8xf32> to vector<128x8xf32>
    %33 = vector.shape_cast %30 : vector<128x8xf32> to vector<1x128x8xf32>
    tpu.vector_store %arg6[%c0_11, %c0_12, %c0_13], %33 {strides = array<i32>} : memref<1x128x8xf32, #tpu.memory_space<vmem>>, vector<1x128x8xf32>,
    return
  }
  func.func @transform_0(%arg0: i32, %arg1: i32) -> (i32, i32, i32, i32, i32) {
    %c0_i32 = arith.constant 0 : i32
    %c0_i32_0 = arith.constant 0 : i32
    %c0_i32_1 = arith.constant 0 : i32
    %c0_i32_2 = arith.constant 0 : i32
    return %arg0, %arg1, %c0_i32, %c0_i32_0, %c0_i32_1 : i32, i32, i32, i32, i32
  }
  func.func @transform_1(%arg0: i32, %arg1: i32) -> (i32, i32) {
    %c0_i32 = arith.constant 0 : i32
    %c0_i32_0 = arith.constant 0 : i32
    %c0_i32_1 = arith.constant 0 : i32
    return %c0_i32, %c0_i32_0 : i32, i32
  }
  func.func @transform_2(%arg0: i32, %arg1: i32) -> (i32, i32) {
    %c0_i32 = arith.constant 0 : i32
    %c0_i32_0 = arith.constant 0 : i32
    %c0_i32_1 = arith.constant 0 : i32
    return %c0_i32, %c0_i32_0 : i32, i32
  }
  func.func @transform_3(%arg0: i32, %arg1: i32) -> (i32, i32) {
    %c0_i32 = arith.constant 0 : i32
    %c0_i32_0 = arith.constant 0 : i32
    %c0_i32_1 = arith.constant 0 : i32
    return %c0_i32, %c0_i32_0 : i32, i32
  }
  func.func @transform_4(%arg0: i32, %arg1: i32) -> (i32, i32, i32) {
    %c0_i32 = arith.constant 0 : i32
    %c0_i32_0 = arith.constant 0 : i32
    return %arg0, %arg1, %c0_i32 : i32, i32, i32
  }
}

</mosaic_0001>

<llo_original>
// kernel: tpu_custom_call.1
$region0: #{tpu_custom_call.1}
  #allocation0 [shape = 'u32[]', space=smem, size = 0x4, offset = 0x4, fixed_abs, tag = 'smem constant byte address 0x4 - core index']
  #allocation1 [shape = 'u32[144,128]{1,0:T(1,128)}', space=vmem, size = 0x12000, scoped, tag = 'internal scratch']
  %s0 = inlined_call_operand.vmem [shape: f32[2,2,10,18,4], index: 0, kind: input, shape index: {}]
  %s1 = inlined_call_operand.vmem [shape: f32[36,8], index: 1, kind: input, shape index: {}]
  %s2 = inlined_call_operand.vmem [shape: f32[1,8], index: 2, kind: input, shape index: {}]
  %s3 = inlined_call_operand.vmem [shape: f32[1,8], index: 3, kind: input, shape index: {}]
  %s4 = inlined_call_operand.vmem [shape: f32[2,256,8], index: 4, kind: output, shape index: {}]
  %s5 = sld [smem:[#allocation0]]
  $region49: #{tpu_custom_call.1} parent=0
    _
  %s7 = ssub.s32 1, %s5
  %s8 = scalar_select 0, %s7, %s5
  loop: start=0, step=1, limit=6
  $region2: #{tpu_custom_call.1} parent=0 // loop_pre_header
    _
  $region3: #{tpu_custom_call.1} parent=0 // loop_header
    %s10 = sphi 0, %s14
    %p11 = scmp.ge.s32.totalorder %s10, 6
    %s17 = sphi 0, %s29
    %s18 = sphi 0, %s25
    %s19 = sphi 0, %s17
    %s20 = sphi 0, %s18
    %s21 = sphi 0, %s19
    %s22 = sphi 0, %s20
    %s34 = sphi 0, %s36
    %s37 = sphi 0, %s34
    %s38 = sphi 0, %s37
    %s54 = sphi 0, %s38
    %s58 = sphi 0, %s58
    %s60 = sphi 0, %s58
    %s61 = sphi 0, %s60
    %s75 = sphi 0, %s61
    %s79 = sphi 0, %s79
    %s81 = sphi 0, %s79
    %s82 = sphi 0, %s81
    %s96 = sphi 0, %s82
    %s100 = sphi 0, %s100
    %s102 = sphi 0, %s100
    %s103 = sphi 0, %s102
    %s117 = sphi 0, %s103
    %s125 = sphi 0, %s127
    %s128 = sphi 0, %s125
    %s129 = sphi 0, %s128
    %s145 = sphi 0, %s129
  $region4: #{tpu_custom_call.1} parent=0 // loop_header_branch
    %13 = sbr.rel (%p11) target = $region8
  $region5: #{tpu_custom_call.1} parent=0 // loop_body
    %s15 = ssub.s32 %s10, 1
    %s16 = ssub.s32 %s10, 2
    %s23 = sadd.s32 1, %s18
    %p24 = scmp.ge.s32.totalorder %s23, 2
    %s25 = scalar_select %p24, 0, %s23
    %s26 = sadd.s32 1, %s17
    %s27 = scalar_select %p24, %s26, %s17
    %p28 = scmp.ge.s32.totalorder %s27, 2
    %s29 = scalar_select %p28, 0, %s27
    %s30 = ssub.s32 %s17, %s29
    %s31 = ssub.s32 %s18, %s25
    %s32 = sor.u32 %s30, %s31
    %p33 = scmp.eq.s32.totalorder %s32, 0
    %s35 = sadd.s32 %s34, 1
    %s36 = scalar_select %p33, %s34, %s35
    %p39 = pneg %p33
    %p40 = scmp.eq.s32.totalorder %s10, 3
    %p41 = por %p39, %p40
    %p42 = scmp.ne.s32.totalorder %s34, %s37
    %p43 = scmp.eq.s32.totalorder %s10, 0
    %p44 = por %p42, %p43
    %p45 = scmp.ne.s32.totalorder %s34, %s37
    %p46 = scmp.eq.s32.totalorder %s15, 3
    %p47 = por %p45, %p46
    %p48 = scmp.ne.s32.totalorder %s37, %s38
    %p49 = scmp.eq.s32.totalorder %s15, 0
    %p50 = por %p48, %p49
    %p51 = scmp.ne.s32.totalorder %s37, %s38
    %p52 = scmp.eq.s32.totalorder %s16, 3
    %p53 = por %p51, %p52
    %p55 = scmp.ne.s32.totalorder %s38, %s54
    %p56 = scmp.eq.s32.totalorder %s16, 0
    %p57 = por %p55, %p56
    %s59 = sadd.s32 %s58, 1
    %p62 = scmp.eq.s32.totalorder %s10, 3
    %p63 = scmp.ne.s32.totalorder %s58, %s60
    %p64 = scmp.eq.s32.totalorder %s10, 0
    %p65 = por %p63, %p64
    %p66 = scmp.ne.s32.totalorder %s58, %s60
    %p67 = scmp.eq.s32.totalorder %s15, 3
    %p68 = por %p66, %p67
    %p69 = scmp.ne.s32.totalorder %s60, %s61
    %p70 = scmp.eq.s32.totalorder %s15, 0
    %p71 = por %p69, %p70
    %p72 = scmp.ne.s32.totalorder %s60, %s61
    %p73 = scmp.eq.s32.totalorder %s16, 3
    %p74 = por %p72, %p73
    %p76 = scmp.ne.s32.totalorder %s61, %s75
    %p77 = scmp.eq.s32.totalorder %s16, 0
    %p78 = por %p76, %p77
    %s80 = sadd.s32 %s79, 1
    %p83 = scmp.eq.s32.totalorder %s10, 3
    %p84 = scmp.ne.s32.totalorder %s79, %s81
    %p85 = scmp.eq.s32.totalorder %s10, 0
    %p86 = por %p84, %p85
    %p87 = scmp.ne.s32.totalorder %s79, %s81
    %p88 = scmp.eq.s32.totalorder %s15, 3
    %p89 = por %p87, %p88
    %p90 = scmp.ne.s32.totalorder %s81, %s82
    %p91 = scmp.eq.s32.totalorder %s15, 0
    %p92 = por %p90, %p91
    %p93 = scmp.ne.s32.totalorder %s81, %s82
    %p94 = scmp.eq.s32.totalorder %s16, 3
    %p95 = por %p93, %p94
    %p97 = scmp.ne.s32.totalorder %s82, %s96
    %p98 = scmp.eq.s32.totalorder %s16, 0
    %p99 = por %p97, %p98
    %s101 = sadd.s32 %s100, 1
    %p104 = scmp.eq.s32.totalorder %s10, 3
    %p105 = scmp.ne.s32.totalorder %s100, %s102
    %p106 = scmp.eq.s32.totalorder %s10, 0
    %p107 = por %p105, %p106
    %p108 = scmp.ne.s32.totalorder %s100, %s102
    %p109 = scmp.eq.s32.totalorder %s15, 3
    %p110 = por %p108, %p109
    %p111 = scmp.ne.s32.totalorder %s102, %s103
    %p112 = scmp.eq.s32.totalorder %s15, 0
    %p113 = por %p111, %p112
    %p114 = scmp.ne.s32.totalorder %s102, %s103
    %p115 = scmp.eq.s32.totalorder %s16, 3
    %p116 = por %p114, %p115
    %p118 = scmp.ne.s32.totalorder %s103, %s117
    %p119 = scmp.eq.s32.totalorder %s16, 0
    %p120 = por %p118, %p119
    %s121 = ssub.s32 %s17, %s29
    %s122 = ssub.s32 %s18, %s25
    %s123 = sor.u32 %s121, %s122
    %p124 = scmp.eq.s32.totalorder %s123, 0
    %s126 = sadd.s32 %s125, 1
    %s127 = scalar_select %p124, %s125, %s126
    %p130 = pneg %p124
    %p131 = scmp.eq.s32.totalorder %s10, 3
    %p132 = por %p130, %p131
    %p133 = scmp.ne.s32.totalorder %s125, %s128
    %p134 = scmp.eq.s32.totalorder %s10, 0
    %p135 = por %p133, %p134
    %p136 = scmp.ne.s32.totalorder %s125, %s128
    %p137 = scmp.eq.s32.totalorder %s15, 3
    %p138 = por %p136, %p137
    %p139 = scmp.ne.s32.totalorder %s128, %s129
    %p140 = scmp.eq.s32.totalorder %s15, 0
    %p141 = por %p139, %p140
    %p142 = scmp.ne.s32.totalorder %s128, %s129
    %p143 = scmp.eq.s32.totalorder %s16, 3
    %p144 = por %p142, %p143
    %p146 = scmp.ne.s32.totalorder %s129, %s145
    %p147 = scmp.eq.s32.totalorder %s16, 0
    %p148 = por %p146, %p147
    %p149 = scmp.le.s32.totalorder 1, %s10
    %p150 = scmp.lt.s32.totalorder %s10, 5
    %p151 = pnand %p149, %p150
    %p152 = pneg %p151
    // Predicated region
    $region9: #{tpu_custom_call.1} parent=5 // pred_check
      _
    $region10: #{tpu_custom_call.1} parent=5 // pred_check_branch
      %154 = sbr.rel (%p151) target = $region12
    $region11: #{tpu_custom_call.1} parent=5 // pred_region
      %s155 = ssub.s32 %s10, 1
      // Predicated region
      $region13: #{tpu_custom_call.1} parent=11 // pred_check
        %p156 = pneg %p71
      $region14: #{tpu_custom_call.1} parent=11 // pred_check_branch
        %158 = sbr.rel (%p156) target = $region16
      $region15: #{tpu_custom_call.1} parent=11 // pred_region
        _
      $region16: #{tpu_custom_call.1} parent=11 // pred_fallthru
        _
      // Predicated region
      $region17: #{tpu_custom_call.1} parent=11 // pred_check
        %p159 = pneg %p92
      $region18: #{tpu_custom_call.1} parent=11 // pred_check_branch
        %161 = sbr.rel (%p159) target = $region20
      $region19: #{tpu_custom_call.1} parent=11 // pred_region
        _
      $region20: #{tpu_custom_call.1} parent=11 // pred_fallthru
        _
      // Predicated region
      $region21: #{tpu_custom_call.1} parent=11 // pred_check
        %p162 = pneg %p113
      $region22: #{tpu_custom_call.1} parent=11 // pred_check_branch
        %164 = sbr.rel (%p162) target = $region24
      $region23: #{tpu_custom_call.1} parent=11 // pred_region
        _
      $region24: #{tpu_custom_call.1} parent=11 // pred_fallthru
        _
    $region12: #{tpu_custom_call.1} parent=5 // pred_fallthru
      _
    %p165 = scmp.lt.s32.totalorder %s10, 4
    // Predicated region
    $region25: #{tpu_custom_call.1} parent=5 // pred_check
      %p166 = pneg %p165
    $region26: #{tpu_custom_call.1} parent=5 // pred_check_branch
      %168 = sbr.rel (%p166) target = $region28
    $region27: #{tpu_custom_call.1} parent=5 // pred_region
      // Predicated region
      $region29: #{tpu_custom_call.1} parent=27 // pred_check
        %p169 = pneg %p44
      $region30: #{tpu_custom_call.1} parent=27 // pred_check_branch
        %171 = sbr.rel (%p169) target = $region32
      $region31: #{tpu_custom_call.1} parent=27 // pred_region
        %p172 = scmp.lt.s32.totalorder %s17, 1
        %s173 = scalar_select %p172, %s17, 1
        %p174 = scmp.lt.s32.totalorder %s18, 1
        %s175 = scalar_select %p174, %s18, 1
        %s176 = smul.addr %s175, 30
        %s177 = smul.addr %s173, 60
        %s178 = sadd.s32 %s176, %s177
        %s179 = smul.addr %s178, 8
        %s180 = scalar_lea.vmem %s0, %s179
      $region32: #{tpu_custom_call.1} parent=27 // pred_fallthru
        _
    $region28: #{tpu_custom_call.1} parent=5 // pred_fallthru
      _
    %p181 = scmp.le.s32.totalorder 1, %s10
    %p182 = scmp.lt.s32.totalorder %s10, 5
    %p183 = pnand %p181, %p182
    %p184 = pneg %p183
    // Predicated region
    $region33: #{tpu_custom_call.1} parent=5 // pred_check
      _
    $region34: #{tpu_custom_call.1} parent=5 // pred_check_branch
      %186 = sbr.rel (%p183) target = $region36
    $region35: #{tpu_custom_call.1} parent=5 // pred_region
      %s187 = ssub.s32 %s10, 1
      %p188 = scmp.lt.s32.totalorder %s19, 1
      %s189 = scalar_select %p188, %s19, 1
      %p190 = scmp.lt.s32.totalorder %s20, 1
      %s191 = scalar_select %p190, %s20, 1
      %s192 = smul.addr %s191, 30
      %s193 = smul.addr %s189, 60
      %s194 = sadd.s32 %s192, %s193
      %s195 = smul.addr %s194, 8
      %s196 = scalar_lea.vmem %s0, %s195
      %p197 = pneg %p50
      %p198 = pneg %p47
      %p199 = pneg %p71
      %p200 = pneg %p68
      %p201 = pneg %p92
      %p202 = pneg %p89
      %p203 = pneg %p113
      %p204 = pneg %p110
      %p205 = pneg %p141
      %p206 = pneg %p138
      %s207 = smul.u32 16, %s20
      %p208 = scmp.lt.s32.totalorder %s19, 1
      %s209 = scalar_select %p208, %s19, 1
      %p210 = scmp.lt.s32.totalorder %s207, 31
      %s211 = scalar_select %p210, %s207, 31
      %s212 = smul.addr %s209, 32
      %s213 = sadd.s32 %s211, %s212
      %s214 = smul.addr %s213, 8
      %s215 = scalar_lea.vmem %s4, %s214
      %p216 = scmp.lt.s32.totalorder %s19, 1
      %s217 = scalar_select %p216, %s19, 1
      %p218 = scmp.lt.s32.totalorder %s20, 1
      %s219 = scalar_select %p218, %s20, 1
      %s220 = smul.addr %s219, 30
      %s221 = smul.addr %s217, 60
      %s222 = sadd.s32 %s220, %s221
      %s223 = smul.addr %s222, 8
      %s224 = scalar_lea.vmem %s0, %s223
      %s225 = smul.u32 16, %s20
      %p226 = scmp.lt.s32.totalorder %s19, 1
      %s227 = scalar_select %p226, %s19, 1
      %p228 = scmp.lt.s32.totalorder %s225, 31
      %s229 = scalar_select %p228, %s225, 31
      %s230 = smul.addr %s227, 32
      %s231 = sadd.s32 %s229, %s230
      %s232 = smul.addr %s231, 8
      %s233 = scalar_lea.vmem %s4, %s232
      %s234 = smul.u32 16, %s20
      %v235 = vld [vmem:[%s224] sm:$0xff]
      %v236 = vld [vmem:[%s224 + $0x8] sm:$0xff]
      %v237 = vld [vmem:[%s224 + $0x10] sm:$0x3]
      %v238 = vld [vmem:[%s224 + $0x18] sm:$0xff]
      %v239 = vld [vmem:[%s224 + $0x20] sm:$0xff]
      %v240 = vld [vmem:[%s224 + $0x28] sm:$0x3]
      %v241 = vld [vmem:[%s224 + $0x30] sm:$0xff]
      %v242 = vld [vmem:[%s224 + $0x38] sm:$0xff]
      %v243 = vld [vmem:[%s224 + $0x40] sm:$0x3]
      %v244 = vld [vmem:[%s224 + $0x48] sm:$0xff]
      %v245 = vld [vmem:[%s224 + $0x50] sm:$0xff]
      %v246 = vld [vmem:[%s224 + $0x58] sm:$0x3]
      %v247 = vld [vmem:[%s224 + $0x60] sm:$0xff]
      %v248 = vld [vmem:[%s224 + $0x68] sm:$0xff]
      %v249 = vld [vmem:[%s224 + $0x70] sm:$0x3]
      %v250 = vld [vmem:[%s224 + $0x78] sm:$0xff]
      %v251 = vld [vmem:[%s224 + $0x80] sm:$0xff]
      %v252 = vld [vmem:[%s224 + $0x88] sm:$0x3]
      %v253 = vld [vmem:[%s224 + $0x90] sm:$0xff]
      %v254 = vld [vmem:[%s224 + $0x98] sm:$0xff]
      %v255 = vld [vmem:[%s224 + $0xa0] sm:$0x3]
      %v256 = vld [vmem:[%s224 + $0xa8] sm:$0xff]
      %v257 = vld [vmem:[%s224 + $0xb0] sm:$0xff]
      %v258 = vld [vmem:[%s224 + $0xb8] sm:$0x3]
      %v259 = vld [vmem:[%s224 + $0xc0] sm:$0xff]
      %v260 = vld [vmem:[%s224 + $0xc8] sm:$0xff]
      %v261 = vld [vmem:[%s224 + $0xd0] sm:$0x3]
      %v262 = vld [vmem:[%s224 + $0xd8] sm:$0xff]
      %v263 = vld [vmem:[%s224 + $0xe0] sm:$0xff]
      %v264 = vld [vmem:[%s224 + $0xe8] sm:$0x3]
      %vm289 = vcmask 1046528
      %v290 = vrot.slane %v235, 1
      %v291 = vrot.slane %v236, 1
      %v292 = vsel %vm289, %v290, %v291
      %v293 = vrot.slane %v237, 1
      %v294 = vsel %vm289, %v291, %v293
      %v295 = vrot.slane %v238, 1
      %v296 = vrot.slane %v239, 1
      %v297 = vsel %vm289, %v295, %v296
      %v298 = vrot.slane %v240, 1
      %v299 = vsel %vm289, %v296, %v298
      %v300 = vrot.slane %v241, 1
      %v301 = vrot.slane %v242, 1
      %v302 = vsel %vm289, %v300, %v301
      %v303 = vrot.slane %v243, 1
      %v304 = vsel %vm289, %v301, %v303
      %v305 = vrot.slane %v244, 1
      %v306 = vrot.slane %v245, 1
      %v307 = vsel %vm289, %v305, %v306
      %v308 = vrot.slane %v246, 1
      %v309 = vsel %vm289, %v306, %v308
      %v310 = vrot.slane %v247, 1
      %v311 = vrot.slane %v248, 1
      %v312 = vsel %vm289, %v310, %v311
      %v313 = vrot.slane %v249, 1
      %v314 = vsel %vm289, %v311, %v313
      %v315 = vrot.slane %v250, 1
      %v316 = vrot.slane %v251, 1
      %v317 = vsel %vm289, %v315, %v316
      %v318 = vrot.slane %v252, 1
      %v319 = vsel %vm289, %v316, %v318
      %v320 = vrot.slane %v253, 1
      %v321 = vrot.slane %v254, 1
      %v322 = vsel %vm289, %v320, %v321
      %v323 = vrot.slane %v255, 1
      %v324 = vsel %vm289, %v321, %v323
      %v325 = vrot.slane %v256, 1
      %v326 = vrot.slane %v257, 1
      %v327 = vsel %vm289, %v325, %v326
      %v328 = vrot.slane %v258, 1
      %v329 = vsel %vm289, %v326, %v328
      %vm330 = vcmask 1045504
      %v331 = vrot.slane %v235, 2
      %v332 = vrot.slane %v236, 2
      %v333 = vsel %vm330, %v331, %v332
      %v334 = vrot.slane %v237, 2
      %v335 = vsel %vm330, %v332, %v334
      %v336 = vrot.slane %v238, 2
      %v337 = vrot.slane %v239, 2
      %v338 = vsel %vm330, %v336, %v337
      %v339 = vrot.slane %v240, 2
      %v340 = vsel %vm330, %v337, %v339
      %v341 = vrot.slane %v241, 2
      %v342 = vrot.slane %v242, 2
      %v343 = vsel %vm330, %v341, %v342
      %v344 = vrot.slane %v243, 2
      %v345 = vsel %vm330, %v342, %v344
      %v346 = vrot.slane %v244, 2
      %v347 = vrot.slane %v245, 2
      %v348 = vsel %vm330, %v346, %v347
      %v349 = vrot.slane %v246, 2
      %v350 = vsel %vm330, %v347, %v349
      %v351 = vrot.slane %v247, 2
      %v352 = vrot.slane %v248, 2
      %v353 = vsel %vm330, %v351, %v352
      %v354 = vrot.slane %v249, 2
      %v355 = vsel %vm330, %v352, %v354
      %v356 = vrot.slane %v250, 2
      %v357 = vrot.slane %v251, 2
      %v358 = vsel %vm330, %v356, %v357
      %v359 = vrot.slane %v252, 2
      %v360 = vsel %vm330, %v357, %v359
      %v361 = vrot.slane %v253, 2
      %v362 = vrot.slane %v254, 2
      %v363 = vsel %vm330, %v361, %v362
      %v364 = vrot.slane %v255, 2
      %v365 = vsel %vm330, %v362, %v364
      %v366 = vrot.slane %v256, 2
      %v367 = vrot.slane %v257, 2
      %v368 = vsel %vm330, %v366, %v367
      %v369 = vrot.slane %v258, 2
      %v370 = vsel %vm330, %v367, %v369
      %v374 = vrot.slane %v259, 1
      %v375 = vrot.slane %v260, 1
      %v376 = vsel %vm289, %v374, %v375
      %v377 = vrot.slane %v261, 1
      %v378 = vsel %vm289, %v375, %v377
      %v379 = vrot.slane %v259, 2
      %v380 = vrot.slane %v260, 2
      %v381 = vsel %vm330, %v379, %v380
      %v382 = vrot.slane %v261, 2
      %v383 = vsel %vm330, %v380, %v382
      %v387 = vrot.slane %v262, 1
      %v388 = vrot.slane %v263, 1
      %v389 = vsel %vm289, %v387, %v388
      %v390 = vrot.slane %v264, 1
      %v391 = vsel %vm289, %v388, %v390
      %v392 = vrot.slane %v262, 2
      %v393 = vrot.slane %v263, 2
      %v394 = vsel %vm330, %v392, %v393
      %v395 = vrot.slane %v264, 2
      %v396 = vsel %vm330, %v393, %v395
      %397 = vrot.lane.b32.xlu0 %v292, 4
      %v398 = vpop.permute.xlu0 %397
      %399 = vrot.lane.b32.xlu0 %v294, 4
      %v400 = vpop.permute.xlu0 %399
      %401 = vrot.lane.b32.xlu0 %v297, 4
      %v402 = vpop.permute.xlu0 %401
      %403 = vrot.lane.b32.xlu0 %v299, 4
      %v404 = vpop.permute.xlu0 %403
      %405 = vrot.lane.b32.xlu0 %v302, 4
      %v406 = vpop.permute.xlu0 %405
      %407 = vrot.lane.b32.xlu0 %v304, 4
      %v408 = vpop.permute.xlu0 %407
      %409 = vrot.lane.b32.xlu0 %v307, 4
      %v410 = vpop.permute.xlu0 %409
      %411 = vrot.lane.b32.xlu0 %v309, 4
      %v412 = vpop.permute.xlu0 %411
      %413 = vrot.lane.b32.xlu0 %v312, 4
      %v414 = vpop.permute.xlu0 %413
      %415 = vrot.lane.b32.xlu0 %v314, 4
      %v416 = vpop.permute.xlu0 %415
      %417 = vrot.lane.b32.xlu0 %v317, 4
      %v418 = vpop.permute.xlu0 %417
      %419 = vrot.lane.b32.xlu0 %v319, 4
      %v420 = vpop.permute.xlu0 %419
      %421 = vrot.lane.b32.xlu0 %v322, 4
      %v422 = vpop.permute.xlu0 %421
      %423 = vrot.lane.b32.xlu0 %v324, 4
      %v424 = vpop.permute.xlu0 %423
      %425 = vrot.lane.b32.xlu0 %v327, 4
      %v426 = vpop.permute.xlu0 %425
      %427 = vrot.lane.b32.xlu0 %v329, 4
      %v428 = vpop.permute.xlu0 %427
      %445 = vrot.lane.b32.xlu0 %v333, 8
      %v446 = vpop.permute.xlu0 %445
      %447 = vrot.lane.b32.xlu0 %v335, 8
      %v448 = vpop.permute.xlu0 %447
      %449 = vrot.lane.b32.xlu0 %v338, 8
      %v450 = vpop.permute.xlu0 %449
      %451 = vrot.lane.b32.xlu0 %v340, 8
      %v452 = vpop.permute.xlu0 %451
      %453 = vrot.lane.b32.xlu0 %v343, 8
      %v454 = vpop.permute.xlu0 %453
      %455 = vrot.lane.b32.xlu0 %v345, 8
      %v456 = vpop.permute.xlu0 %455
      %457 = vrot.lane.b32.xlu0 %v348, 8
      %v458 = vpop.permute.xlu0 %457
      %459 = vrot.lane.b32.xlu0 %v350, 8
      %v460 = vpop.permute.xlu0 %459
      %461 = vrot.lane.b32.xlu0 %v353, 8
      %v462 = vpop.permute.xlu0 %461
      %463 = vrot.lane.b32.xlu0 %v355, 8
      %v464 = vpop.permute.xlu0 %463
      %465 = vrot.lane.b32.xlu0 %v358, 8
      %v466 = vpop.permute.xlu0 %465
      %467 = vrot.lane.b32.xlu0 %v360, 8
      %v468 = vpop.permute.xlu0 %467
      %469 = vrot.lane.b32.xlu0 %v363, 8
      %v470 = vpop.permute.xlu0 %469
      %471 = vrot.lane.b32.xlu0 %v365, 8
      %v472 = vpop.permute.xlu0 %471
      %473 = vrot.lane.b32.xlu0 %v368, 8
      %v474 = vpop.permute.xlu0 %473
      %475 = vrot.lane.b32.xlu0 %v370, 8
      %v476 = vpop.permute.xlu0 %475
      %493 = vrot.lane.b32.xlu0 %v238, 12
      %v494 = vpop.permute.xlu0 %493
      %495 = vrot.lane.b32.xlu0 %v239, 12
      %v496 = vpop.permute.xlu0 %495
      %497 = vrot.lane.b32.xlu0 %v241, 12
      %v498 = vpop.permute.xlu0 %497
      %499 = vrot.lane.b32.xlu0 %v242, 12
      %v500 = vpop.permute.xlu0 %499
      %501 = vrot.lane.b32.xlu0 %v244, 12
      %v502 = vpop.permute.xlu0 %501
      %503 = vrot.lane.b32.xlu0 %v245, 12
      %v504 = vpop.permute.xlu0 %503
      %505 = vrot.lane.b32.xlu0 %v247, 12
      %v506 = vpop.permute.xlu0 %505
      %507 = vrot.lane.b32.xlu0 %v248, 12
      %v508 = vpop.permute.xlu0 %507
      %509 = vrot.lane.b32.xlu0 %v250, 12
      %v510 = vpop.permute.xlu0 %509
      %511 = vrot.lane.b32.xlu0 %v251, 12
      %v512 = vpop.permute.xlu0 %511
      %513 = vrot.lane.b32.xlu0 %v253, 12
      %v514 = vpop.permute.xlu0 %513
      %515 = vrot.lane.b32.xlu0 %v254, 12
      %v516 = vpop.permute.xlu0 %515
      %517 = vrot.lane.b32.xlu0 %v256, 12
      %v518 = vpop.permute.xlu0 %517
      %519 = vrot.lane.b32.xlu0 %v257, 12
      %v520 = vpop.permute.xlu0 %519
      %521 = vrot.lane.b32.xlu0 %v259, 12
      %v522 = vpop.permute.xlu0 %521
      %523 = vrot.lane.b32.xlu0 %v260, 12
      %v524 = vpop.permute.xlu0 %523
      %541 = vrot.lane.b32.xlu0 %v297, 16
      %v542 = vpop.permute.xlu0 %541
      %543 = vrot.lane.b32.xlu0 %v299, 16
      %v544 = vpop.permute.xlu0 %543
      %545 = vrot.lane.b32.xlu0 %v302, 16
      %v546 = vpop.permute.xlu0 %545
      %547 = vrot.lane.b32.xlu0 %v304, 16
      %v548 = vpop.permute.xlu0 %547
      %549 = vrot.lane.b32.xlu0 %v307, 16
      %v550 = vpop.permute.xlu0 %549
      %551 = vrot.lane.b32.xlu0 %v309, 16
      %v552 = vpop.permute.xlu0 %551
      %553 = vrot.lane.b32.xlu0 %v312, 16
      %v554 = vpop.permute.xlu0 %553
      %555 = vrot.lane.b32.xlu0 %v314, 16
      %v556 = vpop.permute.xlu0 %555
      %557 = vrot.lane.b32.xlu0 %v317, 16
      %v558 = vpop.permute.xlu0 %557
      %559 = vrot.lane.b32.xlu0 %v319, 16
      %v560 = vpop.permute.xlu0 %559
      %561 = vrot.lane.b32.xlu0 %v322, 16
      %v562 = vpop.permute.xlu0 %561
      %563 = vrot.lane.b32.xlu0 %v324, 16
      %v564 = vpop.permute.xlu0 %563
      %565 = vrot.lane.b32.xlu0 %v327, 16
      %v566 = vpop.permute.xlu0 %565
      %567 = vrot.lane.b32.xlu0 %v329, 16
      %v568 = vpop.permute.xlu0 %567
      %569 = vrot.lane.b32.xlu0 %v376, 16
      %v570 = vpop.permute.xlu0 %569
      %571 = vrot.lane.b32.xlu0 %v378, 16
      %v572 = vpop.permute.xlu0 %571
      %589 = vrot.lane.b32.xlu0 %v338, 20
      %v590 = vpop.permute.xlu0 %589
      %591 = vrot.lane.b32.xlu0 %v340, 20
      %v592 = vpop.permute.xlu0 %591
      %593 = vrot.lane.b32.xlu0 %v343, 20
      %v594 = vpop.permute.xlu0 %593
      %595 = vrot.lane.b32.xlu0 %v345, 20
      %v596 = vpop.permute.xlu0 %595
      %597 = vrot.lane.b32.xlu0 %v348, 20
      %v598 = vpop.permute.xlu0 %597
      %599 = vrot.lane.b32.xlu0 %v350, 20
      %v600 = vpop.permute.xlu0 %599
      %601 = vrot.lane.b32.xlu0 %v353, 20
      %v602 = vpop.permute.xlu0 %601
      %603 = vrot.lane.b32.xlu0 %v355, 20
      %v604 = vpop.permute.xlu0 %603
      %605 = vrot.lane.b32.xlu0 %v358, 20
      %v606 = vpop.permute.xlu0 %605
      %607 = vrot.lane.b32.xlu0 %v360, 20
      %v608 = vpop.permute.xlu0 %607
      %609 = vrot.lane.b32.xlu0 %v363, 20
      %v610 = vpop.permute.xlu0 %609
      %611 = vrot.lane.b32.xlu0 %v365, 20
      %v612 = vpop.permute.xlu0 %611
      %613 = vrot.lane.b32.xlu0 %v368, 20
      %v614 = vpop.permute.xlu0 %613
      %615 = vrot.lane.b32.xlu0 %v370, 20
      %v616 = vpop.permute.xlu0 %615
      %617 = vrot.lane.b32.xlu0 %v381, 20
      %v618 = vpop.permute.xlu0 %617
      %619 = vrot.lane.b32.xlu0 %v383, 20
      %v620 = vpop.permute.xlu0 %619
      %637 = vrot.lane.b32.xlu0 %v241, 24
      %v638 = vpop.permute.xlu0 %637
      %639 = vrot.lane.b32.xlu0 %v242, 24
      %v640 = vpop.permute.xlu0 %639
      %641 = vrot.lane.b32.xlu0 %v244, 24
      %v642 = vpop.permute.xlu0 %641
      %643 = vrot.lane.b32.xlu0 %v245, 24
      %v644 = vpop.permute.xlu0 %643
      %645 = vrot.lane.b32.xlu0 %v247, 24
      %v646 = vpop.permute.xlu0 %645
      %647 = vrot.lane.b32.xlu0 %v248, 24
      %v648 = vpop.permute.xlu0 %647
      %649 = vrot.lane.b32.xlu0 %v250, 24
      %v650 = vpop.permute.xlu0 %649
      %651 = vrot.lane.b32.xlu0 %v251, 24
      %v652 = vpop.permute.xlu0 %651
      %653 = vrot.lane.b32.xlu0 %v253, 24
      %v654 = vpop.permute.xlu0 %653
      %655 = vrot.lane.b32.xlu0 %v254, 24
      %v656 = vpop.permute.xlu0 %655
      %657 = vrot.lane.b32.xlu0 %v256, 24
      %v658 = vpop.permute.xlu0 %657
      %659 = vrot.lane.b32.xlu0 %v257, 24
      %v660 = vpop.permute.xlu0 %659
      %661 = vrot.lane.b32.xlu0 %v259, 24
      %v662 = vpop.permute.xlu0 %661
      %663 = vrot.lane.b32.xlu0 %v260, 24
      %v664 = vpop.permute.xlu0 %663
      %665 = vrot.lane.b32.xlu0 %v262, 24
      %v666 = vpop.permute.xlu0 %665
      %667 = vrot.lane.b32.xlu0 %v263, 24
      %v668 = vpop.permute.xlu0 %667
      %685 = vrot.lane.b32.xlu0 %v302, 28
      %v686 = vpop.permute.xlu0 %685
      %687 = vrot.lane.b32.xlu0 %v304, 28
      %v688 = vpop.permute.xlu0 %687
      %689 = vrot.lane.b32.xlu0 %v307, 28
      %v690 = vpop.permute.xlu0 %689
      %691 = vrot.lane.b32.xlu0 %v309, 28
      %v692 = vpop.permute.xlu0 %691
      %693 = vrot.lane.b32.xlu0 %v312, 28
      %v694 = vpop.permute.xlu0 %693
      %695 = vrot.lane.b32.xlu0 %v314, 28
      %v696 = vpop.permute.xlu0 %695
      %697 = vrot.lane.b32.xlu0 %v317, 28
      %v698 = vpop.permute.xlu0 %697
      %699 = vrot.lane.b32.xlu0 %v319, 28
      %v700 = vpop.permute.xlu0 %699
      %701 = vrot.lane.b32.xlu0 %v322, 28
      %v702 = vpop.permute.xlu0 %701
      %703 = vrot.lane.b32.xlu0 %v324, 28
      %v704 = vpop.permute.xlu0 %703
      %705 = vrot.lane.b32.xlu0 %v327, 28
      %v706 = vpop.permute.xlu0 %705
      %707 = vrot.lane.b32.xlu0 %v329, 28
      %v708 = vpop.permute.xlu0 %707
      %709 = vrot.lane.b32.xlu0 %v376, 28
      %v710 = vpop.permute.xlu0 %709
      %711 = vrot.lane.b32.xlu0 %v378, 28
      %v712 = vpop.permute.xlu0 %711
      %713 = vrot.lane.b32.xlu0 %v389, 28
      %v714 = vpop.permute.xlu0 %713
      %715 = vrot.lane.b32.xlu0 %v391, 28
      %v716 = vpop.permute.xlu0 %715
      %733 = vrot.lane.b32.xlu0 %v343, 32
      %v734 = vpop.permute.xlu0 %733
      %735 = vrot.lane.b32.xlu0 %v345, 32
      %v736 = vpop.permute.xlu0 %735
      %737 = vrot.lane.b32.xlu0 %v348, 32
      %v738 = vpop.permute.xlu0 %737
      %739 = vrot.lane.b32.xlu0 %v350, 32
      %v740 = vpop.permute.xlu0 %739
      %741 = vrot.lane.b32.xlu0 %v353, 32
      %v742 = vpop.permute.xlu0 %741
      %743 = vrot.lane.b32.xlu0 %v355, 32
      %v744 = vpop.permute.xlu0 %743
      %745 = vrot.lane.b32.xlu0 %v358, 32
      %v746 = vpop.permute.xlu0 %745
      %747 = vrot.lane.b32.xlu0 %v360, 32
      %v748 = vpop.permute.xlu0 %747
      %749 = vrot.lane.b32.xlu0 %v363, 32
      %v750 = vpop.permute.xlu0 %749
      %751 = vrot.lane.b32.xlu0 %v365, 32
      %v752 = vpop.permute.xlu0 %751
      %753 = vrot.lane.b32.xlu0 %v368, 32
      %v754 = vpop.permute.xlu0 %753
      %755 = vrot.lane.b32.xlu0 %v370, 32
      %v756 = vpop.permute.xlu0 %755
      %757 = vrot.lane.b32.xlu0 %v381, 32
      %v758 = vpop.permute.xlu0 %757
      %759 = vrot.lane.b32.xlu0 %v383, 32
      %v760 = vpop.permute.xlu0 %759
      %761 = vrot.lane.b32.xlu0 %v394, 32
      %v762 = vpop.permute.xlu0 %761
      %763 = vrot.lane.b32.xlu0 %v396, 32
      %v764 = vpop.permute.xlu0 %763
      %vm781 = vcmask 31744
      %v782 = vsel %vm781, %v235, %v398
      %v783 = vsel %vm781, %v236, %v400
      %v784 = vsel %vm781, %v238, %v402
      %v785 = vsel %vm781, %v239, %v404
      %v786 = vsel %vm781, %v241, %v406
      %v787 = vsel %vm781, %v242, %v408
      %v788 = vsel %vm781, %v244, %v410
      %v789 = vsel %vm781, %v245, %v412
      %v790 = vsel %vm781, %v247, %v414
      %v791 = vsel %vm781, %v248, %v416
      %v792 = vsel %vm781, %v250, %v418
      %v793 = vsel %vm781, %v251, %v420
      %v794 = vsel %vm781, %v253, %v422
      %v795 = vsel %vm781, %v254, %v424
      %v796 = vsel %vm781, %v256, %v426
      %v797 = vsel %vm781, %v257, %v428
      %vm798 = vcmask 64512
      %v799 = vsel %vm798, %v782, %v446
      %v800 = vsel %vm798, %v783, %v448
      %v801 = vsel %vm798, %v784, %v450
      %v802 = vsel %vm798, %v785, %v452
      %v803 = vsel %vm798, %v786, %v454
      %v804 = vsel %vm798, %v787, %v456
      %v805 = vsel %vm798, %v788, %v458
      %v806 = vsel %vm798, %v789, %v460
      %v807 = vsel %vm798, %v790, %v462
      %v808 = vsel %vm798, %v791, %v464
      %v809 = vsel %vm798, %v792, %v466
      %v810 = vsel %vm798, %v793, %v468
      %v811 = vsel %vm798, %v794, %v470
      %v812 = vsel %vm798, %v795, %v472
      %v813 = vsel %vm798, %v796, %v474
      %v814 = vsel %vm798, %v797, %v476
      %vm815 = vcmask 97280
      %v816 = vsel %vm815, %v799, %v494
      %v817 = vsel %vm815, %v800, %v496
      %v818 = vsel %vm815, %v801, %v498
      %v819 = vsel %vm815, %v802, %v500
      %v820 = vsel %vm815, %v803, %v502
      %v821 = vsel %vm815, %v804, %v504
      %v822 = vsel %vm815, %v805, %v506
      %v823 = vsel %vm815, %v806, %v508
      %v824 = vsel %vm815, %v807, %v510
      %v825 = vsel %vm815, %v808, %v512
      %v826 = vsel %vm815, %v809, %v514
      %v827 = vsel %vm815, %v810, %v516
      %v828 = vsel %vm815, %v811, %v518
      %v829 = vsel %vm815, %v812, %v520
      %v830 = vsel %vm815, %v813, %v522
      %v831 = vsel %vm815, %v814, %v524
      %vm832 = vcmask 130048
      %v833 = vsel %vm832, %v816, %v542
      %v834 = vsel %vm832, %v817, %v544
      %v835 = vsel %vm832, %v818, %v546
      %v836 = vsel %vm832, %v819, %v548
      %v837 = vsel %vm832, %v820, %v550
      %v838 = vsel %vm832, %v821, %v552
      %v839 = vsel %vm832, %v822, %v554
      %v840 = vsel %vm832, %v823, %v556
      %v841 = vsel %vm832, %v824, %v558
      %v842 = vsel %vm832, %v825, %v560
      %v843 = vsel %vm832, %v826, %v562
      %v844 = vsel %vm832, %v827, %v564
      %v845 = vsel %vm832, %v828, %v566
      %v846 = vsel %vm832, %v829, %v568
      %v847 = vsel %vm832, %v830, %v570
      %v848 = vsel %vm832, %v831, %v572
      %vm849 = vcmask 162816
      %v850 = vsel %vm849, %v833, %v590
      %v851 = vsel %vm849, %v834, %v592
      %v852 = vsel %vm849, %v835, %v594
      %v853 = vsel %vm849, %v836, %v596
      %v854 = vsel %vm849, %v837, %v598
      %v855 = vsel %vm849, %v838, %v600
      %v856 = vsel %vm849, %v839, %v602
      %v857 = vsel %vm849, %v840, %v604
      %v858 = vsel %vm849, %v841, %v606
      %v859 = vsel %vm849, %v842, %v608
      %v860 = vsel %vm849, %v843, %v610
      %v861 = vsel %vm849, %v844, %v612
      %v862 = vsel %vm849, %v845, %v614
      %v863 = vsel %vm849, %v846, %v616
      %v864 = vsel %vm849, %v847, %v618
      %v865 = vsel %vm849, %v848, %v620
      %vm866 = vcmask 195584
      %v867 = vsel %vm866, %v850, %v638
      %v868 = vsel %vm866, %v851, %v640
      %v869 = vsel %vm866, %v852, %v642
      %v870 = vsel %vm866, %v853, %v644
      %v871 = vsel %vm866, %v854, %v646
      %v872 = vsel %vm866, %v855, %v648
      %v873 = vsel %vm866, %v856, %v650
      %v874 = vsel %vm866, %v857, %v652
      %v875 = vsel %vm866, %v858, %v654
      %v876 = vsel %vm866, %v859, %v656
      %v877 = vsel %vm866, %v860, %v658
      %v878 = vsel %vm866, %v861, %v660
      %v879 = vsel %vm866, %v862, %v662
      %v880 = vsel %vm866, %v863, %v664
      %v881 = vsel %vm866, %v864, %v666
      %v882 = vsel %vm866, %v865, %v668
      %vm883 = vcmask 228352
      %v884 = vsel %vm883, %v867, %v686
      %v885 = vsel %vm883, %v868, %v688
      %v886 = vsel %vm883, %v869, %v690
      %v887 = vsel %vm883, %v870, %v692
      %v888 = vsel %vm883, %v871, %v694
      %v889 = vsel %vm883, %v872, %v696
      %v890 = vsel %vm883, %v873, %v698
      %v891 = vsel %vm883, %v874, %v700
      %v892 = vsel %vm883, %v875, %v702
      %v893 = vsel %vm883, %v876, %v704
      %v894 = vsel %vm883, %v877, %v706
      %v895 = vsel %vm883, %v878, %v708
      %v896 = vsel %vm883, %v879, %v710
      %v897 = vsel %vm883, %v880, %v712
      %v898 = vsel %vm883, %v881, %v714
      %v899 = vsel %vm883, %v882, %v716
      %vm900 = vcmask 261120
      %v901 = vsel %vm900, %v884, %v734
      %v902 = vsel %vm900, %v885, %v736
      %v903 = vsel %vm900, %v886, %v738
      %v904 = vsel %vm900, %v887, %v740
      %v905 = vsel %vm900, %v888, %v742
      %v906 = vsel %vm900, %v889, %v744
      %v907 = vsel %vm900, %v890, %v746
      %v908 = vsel %vm900, %v891, %v748
      %v909 = vsel %vm900, %v892, %v750
      %v910 = vsel %vm900, %v893, %v752
      %v911 = vsel %vm900, %v894, %v754
      %v912 = vsel %vm900, %v895, %v756
      %v913 = vsel %vm900, %v896, %v758
      %v914 = vsel %vm900, %v897, %v760
      %v915 = vsel %vm900, %v898, %v762
      %v916 = vsel %vm900, %v899, %v764
      %v917 = vld [vmem:[%s1] sm:$0xff]
      %v918 = vld [vmem:[%s1 + $0x8] sm:$0xff]
      %v919 = vld [vmem:[%s1 + $0x10] sm:$0xff]
      %v920 = vld [vmem:[%s1 + $0x18] sm:$0xff]
      %v921 = vld [vmem:[%s1 + $0x20] sm:$0xf]
      %vm922 = vcmask 293888
      %v924 = vsel %vm922, %v901, 0
      %v927 = vsel %vm922, %v902, 0
      %v930 = vsel %vm922, %v903, 0
      %v933 = vsel %vm922, %v904, 0
      %v936 = vsel %vm922, %v905, 0
      %v939 = vsel %vm922, %v906, 0
      %v942 = vsel %vm922, %v907, 0
      %v945 = vsel %vm922, %v908, 0
      %v948 = vsel %vm922, %v909, 0
      %v951 = vsel %vm922, %v910, 0
      %v954 = vsel %vm922, %v911, 0
      %v957 = vsel %vm922, %v912, 0
      %v960 = vsel %vm922, %v913, 0
      %v963 = vsel %vm922, %v914, 0
      %v966 = vsel %vm922, %v915, 0
      %v969 = vsel %vm922, %v916, 0
      %vm971 = vcmask 1043456
      %v973 = vsel %vm971, %v921, 0
      %975 = vmatprep.subr.mxu0 0.0
      %976 = vmatpush1.msra.mxu0 0.0
      %977 = vmatprep.subr.mxu0 0.0
      %978 = vmatpush1.msra.mxu0 0.0
      %979 = vmatprep.subr.mxu0 0.0
      %980 = vmatpush1.msra.mxu0 0.0
      %981 = vmatprep.subr.mxu0 0.0
      %982 = vmatpush1.msra.mxu0 0.0
      %983 = vmatprep.subr.mxu0 0.0
      %984 = vmatpush1.msra.mxu0 0.0
      %985 = vmatprep.subr.mxu0 0.0
      %986 = vmatpush1.msra.mxu0 0.0
      %987 = vmatprep.subr.mxu0 0.0
      %988 = vmatpush1.msra.mxu0 0.0
      %989 = vmatprep.subr.mxu0 0.0
      %990 = vmatpush1.msra.mxu0 0.0
      %991 = vmatprep.subr.mxu0 0.0
      %992 = vmatpush1.msra.mxu0 0.0
      %993 = vmatprep.subr.mxu0 0.0
      %994 = vmatpush1.msra.mxu0 0.0
      %995 = vmatprep.subr.mxu0 0.0
      %996 = vmatpush1.msra.mxu0 0.0
      %997 = vmatprep.subr.mxu0 0.0
      %998 = vmatpush1.msra.mxu0 %v973
      %999 = vmatprep.subr.mxu0 0.0
      %1000 = vmatpush1.msra.mxu0 %v920
      %1001 = vmatprep.subr.mxu0 0.0
      %1002 = vmatpush1.msra.mxu0 %v919
      %1003 = vmatprep.subr.mxu0 0.0
      %1004 = vmatpush1.msra.mxu0 %v918
      %1005 = vmatprep.subr.mxu0 0.0
      %1006 = vmatpush1.msra.mxu0 %v917
      %1007 = vmatprep.subr.mxu0 0.0
      %1008 = vmatpush2.msra.mxu0 0.0
      %1009 = vmatprep.subr.mxu0 0.0
      %1010 = vmatpush2.msra.mxu0 0.0
      %1011 = vmatprep.subr.mxu0 0.0
      %1012 = vmatpush2.msra.mxu0 0.0
      %1013 = vmatprep.subr.mxu0 0.0
      %1014 = vmatpush2.msra.mxu0 0.0
      %1015 = vmatprep.subr.mxu0 0.0
      %1016 = vmatpush2.msra.mxu0 0.0
      %1017 = vmatprep.subr.mxu0 0.0
      %1018 = vmatpush2.msra.mxu0 0.0
      %1019 = vmatprep.subr.mxu0 0.0
      %1020 = vmatpush2.msra.mxu0 0.0
      %1021 = vmatprep.subr.mxu0 0.0
      %1022 = vmatpush2.msra.mxu0 0.0
      %1023 = vmatprep.subr.mxu0 0.0
      %1024 = vmatpush2.msra.mxu0 0.0
      %1025 = vmatprep.subr.mxu0 0.0
      %1026 = vmatpush2.msra.mxu0 0.0
      %1027 = vmatprep.subr.mxu0 0.0
      %1028 = vmatpush2.msra.mxu0 0.0
      %1029 = vmatprep.subr.mxu0 0.0
      %1030 = vmatpush2.msra.mxu0 0.0
      %1031 = vmatprep.subr.mxu0 0.0
      %1032 = vmatpush2.msra.mxu0 0.0
      %1033 = vmatprep.subr.mxu0 0.0
      %1034 = vmatpush2.msra.mxu0 0.0
      %1035 = vmatprep.subr.mxu0 0.0
      %1036 = vmatpush2.msra.mxu0 0.0
      %1037 = vmatprep.subr.mxu0 0.0
      %1038 = vmatpush2.msra.mxu0 0.0
      %1039 = vmatprep.mubr.f32.mxu0 0.0
      %1040 = vmatmul.mubr.f32.gmra.mxu0 %v924
      %v1041 = vpop.f32.mrf.mxu0
      %v1042 = vadd.f32 0.0, %v1041
      %v1043 = vpop.f32.mrf.mxu0
      %1044 = vmatprep.mubr.f32.mxu0 0.0
      %1045 = vmatmul.mubr.f32.gmra.mxu0 %v927
      %v1046 = vpop.f32.mrf.mxu0
      %v1047 = vadd.f32 0.0, %v1046
      %v1048 = vpop.f32.mrf.mxu0
      %1049 = vmatprep.mubr.f32.mxu0 0.0
      %1050 = vmatmul.mubr.f32.gmra.mxu0 %v930
      %v1051 = vpop.f32.mrf.mxu0
      %v1052 = vadd.f32 0.0, %v1051
      %v1053 = vpop.f32.mrf.mxu0
      %1054 = vmatprep.mubr.f32.mxu0 0.0
      %1055 = vmatmul.mubr.f32.gmra.mxu0 %v933
      %v1056 = vpop.f32.mrf.mxu0
      %v1057 = vadd.f32 0.0, %v1056
      %v1058 = vpop.f32.mrf.mxu0
      %1059 = vmatprep.mubr.f32.mxu0 0.0
      %1060 = vmatmul.mubr.f32.gmra.mxu0 %v936
      %v1061 = vpop.f32.mrf.mxu0
      %v1062 = vadd.f32 0.0, %v1061
      %v1063 = vpop.f32.mrf.mxu0
      %1064 = vmatprep.mubr.f32.mxu0 0.0
      %1065 = vmatmul.mubr.f32.gmra.mxu0 %v939
      %v1066 = vpop.f32.mrf.mxu0
      %v1067 = vadd.f32 0.0, %v1066
      %v1068 = vpop.f32.mrf.mxu0
      %1069 = vmatprep.mubr.f32.mxu0 0.0
      %1070 = vmatmul.mubr.f32.gmra.mxu0 %v942
      %v1071 = vpop.f32.mrf.mxu0
      %v1072 = vadd.f32 0.0, %v1071
      %v1073 = vpop.f32.mrf.mxu0
      %1074 = vmatprep.mubr.f32.mxu0 0.0
      %1075 = vmatmul.mubr.f32.gmra.mxu0 %v945
      %v1076 = vpop.f32.mrf.mxu0
      %v1077 = vadd.f32 0.0, %v1076
      %v1078 = vpop.f32.mrf.mxu0
      %1079 = vmatprep.mubr.f32.mxu0 0.0
      %1080 = vmatmul.mubr.f32.gmra.mxu0 %v948
      %v1081 = vpop.f32.mrf.mxu0
      %v1082 = vadd.f32 0.0, %v1081
      %v1083 = vpop.f32.mrf.mxu0
      %1084 = vmatprep.mubr.f32.mxu0 0.0
      %1085 = vmatmul.mubr.f32.gmra.mxu0 %v951
      %v1086 = vpop.f32.mrf.mxu0
      %v1087 = vadd.f32 0.0, %v1086
      %v1088 = vpop.f32.mrf.mxu0
      %1089 = vmatprep.mubr.f32.mxu0 0.0
      %1090 = vmatmul.mubr.f32.gmra.mxu0 %v954
      %v1091 = vpop.f32.mrf.mxu0
      %v1092 = vadd.f32 0.0, %v1091
      %v1093 = vpop.f32.mrf.mxu0
      %1094 = vmatprep.mubr.f32.mxu0 0.0
      %1095 = vmatmul.mubr.f32.gmra.mxu0 %v957
      %v1096 = vpop.f32.mrf.mxu0
      %v1097 = vadd.f32 0.0, %v1096
      %v1098 = vpop.f32.mrf.mxu0
      %1099 = vmatprep.mubr.f32.mxu0 0.0
      %1100 = vmatmul.mubr.f32.gmra.mxu0 %v960
      %v1101 = vpop.f32.mrf.mxu0
      %v1102 = vadd.f32 0.0, %v1101
      %v1103 = vpop.f32.mrf.mxu0
      %1104 = vmatprep.mubr.f32.mxu0 0.0
      %1105 = vmatmul.mubr.f32.gmra.mxu0 %v963
      %v1106 = vpop.f32.mrf.mxu0
      %v1107 = vadd.f32 0.0, %v1106
      %v1108 = vpop.f32.mrf.mxu0
      %1109 = vmatprep.mubr.f32.mxu0 0.0
      %1110 = vmatmul.mubr.f32.gmra.mxu0 %v966
      %v1111 = vpop.f32.mrf.mxu0
      %v1112 = vadd.f32 0.0, %v1111
      %v1113 = vpop.f32.mrf.mxu0
      %1114 = vmatprep.mubr.f32.mxu0 0.0
      %1115 = vmatmul.mubr.f32.gmra.mxu0 %v969
      %v1116 = vpop.f32.mrf.mxu0
      %v1117 = vadd.f32 0.0, %v1116
      %v1118 = vpop.f32.mrf.mxu0
      %1119 = vdwg.mxu0
      %v1120 = vld [vmem:[%s2] sm:$0x1]
      %v1122 = vlaneseq
      %v1123 = vshrl.u32 %v1122, 7
      %v1124 = vsub.s32 0, %v1123
      %v1125 = vrot.slane %v1120, %v1124
      %v1127 = vmul.f32 %v1042, %v1125
      %v1128 = vmul.f32 %v1047, %v1125
      %v1129 = vmul.f32 %v1052, %v1125
      %v1130 = vmul.f32 %v1057, %v1125
      %v1131 = vmul.f32 %v1062, %v1125
      %v1132 = vmul.f32 %v1067, %v1125
      %v1133 = vmul.f32 %v1072, %v1125
      %v1134 = vmul.f32 %v1077, %v1125
      %v1135 = vmul.f32 %v1082, %v1125
      %v1136 = vmul.f32 %v1087, %v1125
      %v1137 = vmul.f32 %v1092, %v1125
      %v1138 = vmul.f32 %v1097, %v1125
      %v1139 = vmul.f32 %v1102, %v1125
      %v1140 = vmul.f32 %v1107, %v1125
      %v1141 = vmul.f32 %v1112, %v1125
      %v1142 = vmul.f32 %v1117, %v1125
      %v1143 = vld [vmem:[%s3] sm:$0x1]
      %v1145 = vlaneseq
      %v1146 = vshrl.u32 %v1145, 7
      %v1147 = vsub.s32 0, %v1146
      %v1148 = vrot.slane %v1143, %v1147
      %v1150 = vadd.f32 %v1127, %v1148
      %v1151 = vadd.f32 %v1128, %v1148
      %v1152 = vadd.f32 %v1129, %v1148
      %v1153 = vadd.f32 %v1130, %v1148
      %v1154 = vadd.f32 %v1131, %v1148
      %v1155 = vadd.f32 %v1132, %v1148
      %v1156 = vadd.f32 %v1133, %v1148
      %v1157 = vadd.f32 %v1134, %v1148
      %v1158 = vadd.f32 %v1135, %v1148
      %v1159 = vadd.f32 %v1136, %v1148
      %v1160 = vadd.f32 %v1137, %v1148
      %v1161 = vadd.f32 %v1138, %v1148
      %v1162 = vadd.f32 %v1139, %v1148
      %v1163 = vadd.f32 %v1140, %v1148
      %v1164 = vadd.f32 %v1141, %v1148
      %v1165 = vadd.f32 %v1142, %v1148
      %v1166 = vmax.f32 %v1150, 0.0
      %v1167 = vmax.f32 %v1151, 0.0
      %v1168 = vmax.f32 %v1152, 0.0
      %v1169 = vmax.f32 %v1153, 0.0
      %v1170 = vmax.f32 %v1154, 0.0
      %v1171 = vmax.f32 %v1155, 0.0
      %v1172 = vmax.f32 %v1156, 0.0
      %v1173 = vmax.f32 %v1157, 0.0
      %v1174 = vmax.f32 %v1158, 0.0
      %v1175 = vmax.f32 %v1159, 0.0
      %v1176 = vmax.f32 %v1160, 0.0
      %v1177 = vmax.f32 %v1161, 0.0
      %v1178 = vmax.f32 %v1162, 0.0
      %v1179 = vmax.f32 %v1163, 0.0
      %v1180 = vmax.f32 %v1164, 0.0
      %v1181 = vmax.f32 %v1165, 0.0
      %1182 = vst.msk [vmem:[%s233] sm:$0xff] %vm798, %v1166
      %1183 = vst.msk [vmem:[%s233 + $0x8] sm:$0xff] %vm798, %v1167
      %1184 = vst.msk [vmem:[%s233 + $0x10] sm:$0xff] %vm798, %v1168
      %1185 = vst.msk [vmem:[%s233 + $0x18] sm:$0xff] %vm798, %v1169
      %1186 = vst.msk [vmem:[%s233 + $0x20] sm:$0xff] %vm798, %v1170
      %1187 = vst.msk [vmem:[%s233 + $0x28] sm:$0xff] %vm798, %v1171
      %1188 = vst.msk [vmem:[%s233 + $0x30] sm:$0xff] %vm798, %v1172
      %1189 = vst.msk [vmem:[%s233 + $0x38] sm:$0xff] %vm798, %v1173
      %1190 = vst.msk [vmem:[%s233 + $0x40] sm:$0xff] %vm798, %v1174
      %1191 = vst.msk [vmem:[%s233 + $0x48] sm:$0xff] %vm798, %v1175
      %1192 = vst.msk [vmem:[%s233 + $0x50] sm:$0xff] %vm798, %v1176
      %1193 = vst.msk [vmem:[%s233 + $0x58] sm:$0xff] %vm798, %v1177
      %1194 = vst.msk [vmem:[%s233 + $0x60] sm:$0xff] %vm798, %v1178
      %1195 = vst.msk [vmem:[%s233 + $0x68] sm:$0xff] %vm798, %v1179
      %1196 = vst.msk [vmem:[%s233 + $0x70] sm:$0xff] %vm798, %v1180
      %1197 = vst.msk [vmem:[%s233 + $0x78] sm:$0xff] %vm798, %v1181
      %s1198 = smul.u32 16, %s20
      %p1199 = scmp.lt.s32.totalorder %s19, 1
      %s1200 = scalar_select %p1199, %s19, 1
      %p1201 = scmp.lt.s32.totalorder %s1198, 31
      %s1202 = scalar_select %p1201, %s1198, 31
      %s1203 = smul.addr %s1200, 32
      %s1204 = sadd.s32 %s1202, %s1203
      %s1205 = smul.addr %s1204, 8
      %s1206 = scalar_lea.vmem %s4, %s1205
      // Predicated region
      $region37: #{tpu_custom_call.1} parent=35 // pred_check
        %p1207 = pneg %p138
      $region38: #{tpu_custom_call.1} parent=35 // pred_check_branch
        %1209 = sbr.rel (%p1207) target = $region40
      $region39: #{tpu_custom_call.1} parent=35 // pred_region
        %s1210 = smul.u32 16, %s20
      $region40: #{tpu_custom_call.1} parent=35 // pred_fallthru
        _
    $region36: #{tpu_custom_call.1} parent=5 // pred_fallthru
      _
    %p1211 = scmp.le.s32.totalorder 2, %s10
    // Predicated region
    $region41: #{tpu_custom_call.1} parent=5 // pred_check
      %p1212 = pneg %p1211
    $region42: #{tpu_custom_call.1} parent=5 // pred_check_branch
      %1214 = sbr.rel (%p1212) target = $region44
    $region43: #{tpu_custom_call.1} parent=5 // pred_region
      %s1215 = ssub.s32 %s10, 2
      // Predicated region
      $region45: #{tpu_custom_call.1} parent=43 // pred_check
        %p1216 = pneg %p144
      $region46: #{tpu_custom_call.1} parent=43 // pred_check_branch
        %1218 = sbr.rel (%p1216) target = $region48
      $region47: #{tpu_custom_call.1} parent=43 // pred_region
        %s1219 = smul.u32 16, %s22
        %p1220 = scmp.lt.s32.totalorder %s21, 1
        %s1221 = scalar_select %p1220, %s21, 1
        %p1222 = scmp.lt.s32.totalorder %s1219, 31
        %s1223 = scalar_select %p1222, %s1219, 31
        %s1224 = smul.addr %s1221, 32
        %s1225 = sadd.s32 %s1223, %s1224
        %s1226 = smul.addr %s1225, 8
        %s1227 = scalar_lea.vmem %s4, %s1226
      $region48: #{tpu_custom_call.1} parent=43 // pred_fallthru
        _
    $region44: #{tpu_custom_call.1} parent=5 // pred_fallthru
      _
  $region6: #{tpu_custom_call.1} parent=0 // loop_footer
    %s14 = sadd.s32 1, %s10
  $region7: #{tpu_custom_call.1} parent=0 // loop_footer_branch
    %9 = sbr.rel target = $region3
  $region8: #{tpu_custom_call.1} parent=0 // loop_exit
    _

</llo_original>
